<compile_context>
chip_gen: v6e
topology: v6e:2x2x1
jax: 0.10.0
libtpu: 0.0.40
codegen_flags: <defaults>
</compile_context>

<pallas_src>
import jax
import jax.numpy as jnp
from jax.experimental import pallas as pl
from jax.experimental.pallas import tpu as pltpu

_LANE = 128


def _scale_kernel(x_ref, w_ref, o_ref):
    # x_ref: (br, bn), w_ref: (br, 1) -> per-row broadcast multiply on the VPU.
    o_ref[...] = x_ref[...] * w_ref[...]


def _round_up(v, m):
    return (v + m - 1) // m * m


def _cdiv(a, b):
    return (a + b - 1) // b


def scale_module_forward(x, weight, *, target_block_bytes=1 << 20, donate_x=False):
    """Pallas TPU implementation of _ScaleModule.forward: torch.mul(self.weight, x).

    x:      (B, C, H, W) NCHW activations.
    weight: per-channel scale (e.g. shape (1, C, 1, 1)) or scalar, broadcast over B, H, W.
    """
    B, C, H, W = x.shape
    R, N = B * C, H * W

    # torch.mul promotes to the wider of the two dtypes; mirror that.
    out_dtype = jnp.promote_types(x.dtype, jnp.asarray(weight).dtype)
    itemsize = jnp.dtype(out_dtype).itemsize
    sub_pack = {4: 8, 2: 16, 1: 32}.get(itemsize, 8)  # packed sublanes per vreg

    w_flat = jnp.ravel(jnp.asarray(weight, out_dtype))
    if w_flat.size == 1:
        w_flat = jnp.broadcast_to(w_flat, (C,))
    if w_flat.size != C:
        # TODO(synk): general broadcast shapes for `dims` other than per-channel/scalar.
        raise ValueError(
            f"weight with {w_flat.size} elements is not a per-channel scale for C={C}")

    # Lane-dense 2-D view: rows = B*C (sublane axis), lanes = H*W. Contiguous reshape only.
    x2 = x.astype(out_dtype).reshape(R, N)
    w2 = jnp.tile(w_flat, B).reshape(R, 1)  # per-row scale column (~R*itemsize bytes)

    # ---- tile sizing: full-sublane, 128-multiple lanes, ~target_block_bytes per block ----
    n128 = _round_up(N, _LANE)
    bn_cap = max(_LANE, (target_block_bytes // (sub_pack * itemsize)) // _LANE * _LANE)
    nj = _cdiv(n128, min(n128, bn_cap))           # number of lane chunks
    bn = _round_up(_cdiv(n128, nj), _LANE)        # lane tile (multiple of 128)
    Np = nj * bn

    r_pad = _round_up(R, sub_pack)
    br_cap = max(sub_pack,
                 (target_block_bytes // (bn * itemsize)) // sub_pack * sub_pack)
    ni = _cdiv(r_pad, min(r_pad, br_cap))         # number of row chunks
    br = _round_up(_cdiv(r_pad, ni), sub_pack)    # row tile (multiple of packed sublanes)
    Rp = ni * br

    # One-time pad (only when needed) so every block is unmasked and lane-dense.
    if (Rp, Np) != (R, N):
        x2 = jnp.pad(x2, ((0, Rp - R), (0, Np - N)))
    if Rp != R:
        w2 = jnp.pad(w2, ((0, Rp - R), (0, 0)))

    grid = (Rp // br, Np // bn)

    # Scoped-VMEM estimate: in + out blocks double-buffered, plus the tiny weight column.
    block_bytes = br * bn * itemsize
    vmem_bytes = 4 * block_bytes + 4 * br * itemsize + (1 << 20)

    out = pl.pallas_call(
        _scale_kernel,
        out_shape=jax.ShapeDtypeStruct((Rp, Np), out_dtype),
        grid=grid,
        in_specs=[
            pl.BlockSpec((br, bn), lambda i, j: (i, j)),
            pl.BlockSpec((br, 1), lambda i, j: (i, 0)),
        ],
        out_specs=pl.BlockSpec((br, bn), lambda i, j: (i, j)),
        compiler_params=pltpu.CompilerParams(
            dimension_semantics=("parallel", "parallel"),
            vmem_limit_bytes=int(min(max(vmem_bytes, 8 << 20), 32 << 20)),
        ),
        input_output_aliases={0: 0} if donate_x else {},
    )(x2, w2)

    if (Rp, Np) != (R, N):
        out = out[:R, :N]
    return out.reshape(B, C, H, W)


def init_scale_module_params(dims, init_scale=1.0):
    """Mirror of _ScaleModule.__init__: weight = ones(*dims) * init_scale, bias = None."""
    return {"weight": jnp.ones(dims, jnp.float32) * init_scale}


if __name__ == "__main__":
    B, C, H, W = 2, 4, 16, 16
    key = jax.random.PRNGKey(0)
    kx, kw = jax.random.split(key)

    x = jax.random.normal(kx, (B, C, H, W), jnp.float32)
    # Module init is ones * init_scale; add deterministic per-channel noise so every channel
    # carries a distinct scale (exercises the broadcast path; forward semantics unchanged).
    params = init_scale_module_params((1, C, 1, 1), init_scale=0.1)
    weight = params["weight"] + 0.05 * jax.random.normal(kw, (1, C, 1, 1), jnp.float32)

    fwd = jax.jit(scale_module_forward)
    out = jax.block_until_ready(fwd(x, weight))

    assert out.shape == (B, C, H, W), out.shape
    ref = weight * x  # reference: torch.mul(self.weight, x)
    assert jnp.allclose(out, ref, atol=1e-6, rtol=1e-6), float(jnp.max(jnp.abs(out - ref)))
    print("KERNEL_OK")
</pallas_src>

<mosaic_0001>
module attributes {stable_mosaic.version = 11 : i64} {
  func.func @_scale_kernel(%arg0: i32, %arg1: i32, %arg2: memref<8x256xf32, #tpu.memory_space<vmem>>, %arg3: memref<8x1xf32, #tpu.memory_space<vmem>>, %arg4: memref<8x256xf32, #tpu.memory_space<vmem>>) attributes {dimension_semantics = [#tpu.dimension_semantics<parallel>, #tpu.dimension_semantics<parallel>], iteration_bounds = array<i64: 1, 1>, scalar_prefetch = 0 : i64, scratch_operands = 0 : i64, tpu.core_type = #tpu.core_type<tc>, window_params = [{transform_indices = @transform_0, window_bounds = array<i64: 8, 256>}, {transform_indices = @transform_1, window_bounds = array<i64: 8, 1>}, {transform_indices = @transform_2, window_bounds = array<i64: 8, 256>}]} {
    %c0 = arith.constant 0 : index
    %c0_0 = arith.constant 0 : index
    %0 = vector.load %arg2[%c0, %c0_0] : memref<8x256xf32, #tpu.memory_space<vmem>>, vector<8x256xf32>
    %c0_1 = arith.constant 0 : index
    %c0_2 = arith.constant 0 : index
    %1 = vector.load %arg3[%c0_1, %c0_2] : memref<8x1xf32, #tpu.memory_space<vmem>>, vector<8x1xf32>
    %2 = vector.broadcast %1 : vector<8x1xf32> to vector<8x256xf32>
    %3 = arith.mulf %0, %2 : vector<8x256xf32>
    %c0_3 = arith.constant 0 : index
    %c0_4 = arith.constant 0 : index
    %4 = vector.load %arg4[%c0_3, %c0_4] : memref<8x256xf32, #tpu.memory_space<vmem>>, vector<8x256xf32>
    tpu.vector_store %arg4[%c0_3, %c0_4], %3 {strides = array<i32>} : memref<8x256xf32, #tpu.memory_space<vmem>>, vector<8x256xf32>,
    return
  }
  func.func @transform_0(%arg0: i32, %arg1: i32) -> (i32, i32) {
    %c0_i32 = arith.constant 0 : i32
    return %arg0, %arg1 : i32, i32
  }
  func.func @transform_1(%arg0: i32, %arg1: i32) -> (i32, i32) {
    %c0_i32 = arith.constant 0 : i32
    %c0_i32_0 = arith.constant 0 : i32
    return %arg0, %c0_i32 : i32, i32
  }
  func.func @transform_2(%arg0: i32, %arg1: i32) -> (i32, i32) {
    %c0_i32 = arith.constant 0 : i32
    return %arg0, %arg1 : i32, i32
  }
}

</mosaic_0001>

<llo_original>
// kernel: tile.0
$region0: #{tile.0}
  %s0 = inlined_call_operand.vmem [shape: f32[2,4], index: 0, kind: input, shape index: {}]
  %s1 = inlined_call_operand.vmem [shape: f32[8,1], index: 1, kind: output, shape index: {}]
  $region1: #{tile.0} parent=0
    #allocation0 [shape = 'u8[4096]{0}', space=vmem, size = 0x1000, scoped, tag = 'scoped mem for input reshape']
    %s3 = sshll.u32 1, 2
    %s4 = ssub.s32 %s3, 1
    %v5 = vld [vmem:[%s0] sm:%s4]
    %6 = vst [vmem:[#allocation0] sm:%s4] %v5
    %v7 = vld [vmem:[#allocation0] sm:$0x3]
    %vm8 = vcmask 7168
    %9 = vst.msk [vmem:[%s1] ss:$4 sm:$0x3] %vm8, %v7
    %v10 = vld [vmem:[#allocation0] sm:$0x3]
    %11 = vrot.lane.b32.xlu0 %v10, 127
    %v12 = vpop.permute.xlu0 %11
    %vm13 = vcmask 7168
    %s14 = scalar_lea.vmem %s1, 1
    %15 = vst.msk [vmem:[%s14] ss:$4 sm:$0x3] %vm13, %v12
    %v16 = vld [vmem:[#allocation0] sm:$0x3]
    %17 = vrot.lane.b32.xlu0 %v16, 126
    %v18 = vpop.permute.xlu0 %17
    %vm19 = vcmask 7168
    %s20 = scalar_lea.vmem %s1, 2
    %21 = vst.msk [vmem:[%s20] ss:$4 sm:$0x3] %vm19, %v18
    %v22 = vld [vmem:[#allocation0] sm:$0x3]
    %23 = vrot.lane.b32.xlu0 %v22, 125
    %v24 = vpop.permute.xlu0 %23
    %vm25 = vcmask 7168
    %s26 = scalar_lea.vmem %s1, 3
    %27 = vst.msk [vmem:[%s26] ss:$4 sm:$0x3] %vm25, %v24

// kernel: tile.6
$region0: #{tile.6}
  #allocation0 [shape = 's32[1]{0}', space=sflag, size = 0x4, scoped, tag = 'scoped memory for tile.6']
  %s0 = inlined_call_operand.vmem [shape: f32[4], index: 0, kind: input, shape index: {}]
  %s1 = inlined_call_operand.vmem [shape: f32[2,4], index: 1, kind: output, shape index: {}]
  // Predicated region
  $region2: #{tile.6} parent=0 // pred_check
    _
  $region3: #{tile.6} parent=0 // pred_check_branch
    %3 = sbr.rel (0) target = $region5
  $region4: #{tile.6} parent=0 // pred_region
    _
  $region5: #{tile.6} parent=0 // pred_fallthru
    _
  %v4 = vld [vmem:[%s0] ss:$0 sm:$0xff]
  %5 = vst [vmem:[%s1] sm:$0x3] %v4

// kernel: scale_module_forward.1
$region0: #{scale_module_forward.1}
  #allocation0 [shape = 'u32[]', space=smem, size = 0x4, offset = 0x4, fixed_abs, tag = 'smem constant byte address 0x4 - core index']
  #allocation1 [shape = 'u32[144,128]{1,0:T(1,128)}', space=vmem, size = 0x12000, scoped, tag = 'internal scratch']
  %s0 = inlined_call_operand.vmem [shape: f32[8,256], index: 0, kind: input, shape index: {}]
  %s1 = inlined_call_operand.vmem [shape: f32[8,1], index: 1, kind: input, shape index: {}]
  %s2 = inlined_call_operand.vmem [shape: f32[8,256], index: 2, kind: output, shape index: {}]
  %s3 = sld [smem:[#allocation0]]
  $region18: #{scale_module_forward.1} parent=0
    _
  %s5 = ssub.s32 1, %s3
  %s6 = scalar_select 0, %s5, %s3
  // Predicated region
  $region2: #{scale_module_forward.1} parent=0 // pred_check
    _
  $region3: #{scale_module_forward.1} parent=0 // pred_check_branch
    %8 = sbr.rel (0) target = $region5
  $region4: #{scale_module_forward.1} parent=0 // pred_region
    _
  $region5: #{scale_module_forward.1} parent=0 // pred_fallthru
    _
  // Predicated region
  $region6: #{scale_module_forward.1} parent=0 // pred_check
    _
  $region7: #{scale_module_forward.1} parent=0 // pred_check_branch
    %10 = sbr.rel (0) target = $region9
  $region8: #{scale_module_forward.1} parent=0 // pred_region
    _
  $region9: #{scale_module_forward.1} parent=0 // pred_fallthru
    _
  %v11 = vld [vmem:[%s0] sm:$0xff]
  %v12 = vld [vmem:[%s0 + $0x8] sm:$0xff]
  %v13 = vld [vmem:[%s1] sm:$0xff]
  %15 = vset.pattern.permute.xlu0 0
  %16 = vperm.xlu0 %15, %v13
  %v17 = vpop.permute.xlu0 %16
  %v19 = vmul.f32 %v11, %v17
  %v20 = vmul.f32 %v12, %v17
  %21 = vst [vmem:[%s2] sm:$0xff] %v19
  %22 = vst [vmem:[%s2 + $0x8] sm:$0xff] %v20
  // Predicated region
  $region10: #{scale_module_forward.1} parent=0 // pred_check
    _
  $region11: #{scale_module_forward.1} parent=0 // pred_check_branch
    %24 = sbr.rel (0) target = $region13
  $region12: #{scale_module_forward.1} parent=0 // pred_region
    _
  $region13: #{scale_module_forward.1} parent=0 // pred_fallthru
    _
  // Predicated region
  $region14: #{scale_module_forward.1} parent=0 // pred_check
    _
  $region15: #{scale_module_forward.1} parent=0 // pred_check_branch
    %26 = sbr.rel (0) target = $region17
  $region16: #{scale_module_forward.1} parent=0 // pred_region
    _
  $region17: #{scale_module_forward.1} parent=0 // pred_fallthru
    _

</llo_original>
